<compile_context>
chip_gen: v7x
topology: tpu7x:2x2x1
jax: 0.10.0
libtpu: 0.0.40
codegen_flags: <defaults>
</compile_context>

<pallas_src>
import functools

import jax
import jax.numpy as jnp
from jax.experimental import pallas as pl
from jax.experimental.pallas import tpu as pltpu


def _round_up(x, m):
    return ((x + m - 1) // m) * m


def _sgc_compute(x, w1, b1, w2, b2, o_ref):
    # hidden = tanh(x @ W1 + b1)   -- MXU matmul, f32 accumulation.
    h = jnp.dot(x, w1, preferred_element_type=jnp.float32)
    h = jnp.tanh(h + b1)
    # out = hidden @ W2 + b2       -- second MXU matmul, f32 accumulation.
    out = jnp.dot(h.astype(w2.dtype), w2, preferred_element_type=jnp.float32)
    o_ref[...] = (out + b2).astype(o_ref.dtype)


def _sgc_kernel(x_ref, w1_ref, b1_ref, w2_ref, b2_ref, o_ref):
    """Aligned path: the last-hop x tile arrives via the BlockSpec pipeline."""
    _sgc_compute(x_ref[...], w1_ref[...], b1_ref[...], w2_ref[...],
                 b2_ref[...], o_ref)


def _sgc_kernel_gather(xs_hbm, w1_ref, b1_ref, w2_ref, b2_ref, o_ref,
                       xbuf, sem, *, row_tile, col_off, feat, n_rows, n_tiles):
    """Unaligned path (F % 128 != 0, num_hops > 1).

    xs stays in HBM (memory_space=pl.ANY); the last-hop chunk is pulled with a
    manual, double-buffered DMA at element offset `col_off`, which keeps the
    dominant x read at 1x traffic (vs 3x for an XLA slice + re-read).
    """
    i = pl.program_id(0)
    last = n_tiles - 1
    rem = n_rows - last * row_tile          # rows in the last tile (static)

    def _copy_full(step, slot):
        start = pl.multiple_of(step * row_tile, 8)
        return pltpu.make_async_copy(
            xs_hbm.at[pl.ds(start, row_tile), pl.ds(col_off, feat)],
            xbuf.at[slot], sem.at[slot])

    def _copy_last(slot):
        return pltpu.make_async_copy(
            xs_hbm.at[pl.ds(last * row_tile, rem), pl.ds(col_off, feat)],
            xbuf.at[slot, pl.ds(0, rem), :], sem.at[slot])

    def _start(step, slot):
        if rem == row_tile:                 # every tile is a full tile
            _copy_full(step, slot).start()
        elif n_tiles == 1:                  # single (partial) tile
            _copy_last(slot).start()
        else:
            @pl.when(step < last)
            def _():
                _copy_full(step, slot).start()

            @pl.when(step == last)
            def _():
                _copy_last(slot).start()

    def _wait(step, slot):
        if rem == row_tile:
            _copy_full(step, slot).wait()
        elif n_tiles == 1:
            _copy_last(slot).wait()
        else:
            @pl.when(step < last)
            def _():
                _copy_full(step, slot).wait()

            @pl.when(step == last)
            def _():
                _copy_last(slot).wait()

    slot = i % 2

    @pl.when(i == 0)
    def _():                                # prime the pipeline
        _start(i, slot)

    _wait(i, slot)                          # this step's tile is now in VMEM

    @pl.when(i + 1 < n_tiles)
    def _():                                # prefetch next tile into other slot
        _start(i + 1, 1 - slot)

    # Rows past `rem` in the (possibly partial) last tile hold stale VMEM;
    # every output row depends only on its own x row and Pallas masks the
    # partial out-block store, so stale rows never reach HBM as valid data.
    _sgc_compute(xbuf[slot], w1_ref[...], b1_ref[...], w2_ref[...],
                 b2_ref[...], o_ref)


def _pick_row_tile(n_rows, feat, itemsize, *, target_tile_bytes=2 << 20,
                   max_tile_rows=8192, min_steps=8):
    """Balanced row tiling: >= min_steps (even) grid steps whenever the row
    count allows it, ~target_tile_bytes per x tile, capped at max_tile_rows,
    and always a multiple of 8 sublanes."""
    n_pad = _round_up(max(n_rows, 8), 8)
    max_rows = max(8, min(max_tile_rows,
                          _round_up(target_tile_bytes // max(feat * itemsize, 1), 8)))
    n_steps = max(min_steps, -(-n_pad // max_rows))
    n_steps = min(n_steps, n_pad // 8)      # never drop below 8-row tiles
    if n_steps > 1 and n_steps % 2:
        n_steps += 1                        # even grid: balanced v7x megacore
    return _round_up(-(-n_pad // n_steps), 8)


def sgc_forward(xs, w1_t, b1, w2_t, b2, num_feats, *, row_tile=None,
                out_dtype=jnp.bfloat16):
    """xs: [N, K*num_feats]  ->  [N, num_labels].

    w1_t: [num_feats, num_feats]   (dense weight, pre-transposed: x @ w1_t)
    b1  : [num_feats]
    w2_t: [num_feats, num_labels]  (out_proj weight, pre-transposed)
    b2  : [num_labels]
    """
    N, KF = xs.shape
    F = num_feats
    assert KF % F == 0, "xs last dim must be a multiple of num_feats"
    num_hops = KF // F
    L = w2_t.shape[1]

    if row_tile is None:
        row_tile = _pick_row_tile(N, F, jnp.dtype(xs.dtype).itemsize)
    row_tile = max(8, _round_up(row_tile, 8))
    n_tiles = int(pl.cdiv(N, row_tile))
    grid = (n_tiles,)

    # Biases kept 2-D [1, dim] so they broadcast cleanly against [row_tile, dim].
    b1_2d = b1.reshape(1, F)
    b2_2d = b2.reshape(1, L)

    out_shape = jax.ShapeDtypeStruct((N, L), out_dtype)
    # Weights/biases: constant index_maps -> fetched once, resident in VMEM.
    weight_specs = [
        pl.BlockSpec((F, F), lambda i: (0, 0)),      # W1^T
        pl.BlockSpec((1, F), lambda i: (0, 0)),      # b1
        pl.BlockSpec((F, L), lambda i: (0, 0)),      # W2^T
        pl.BlockSpec((1, L), lambda i: (0, 0)),      # b2
    ]
    out_spec = pl.BlockSpec((row_tile, L), lambda i: (i, 0))

    if num_hops == 1 or F % 128 == 0:
        # Aligned: pick the last F-wide hop chunk via the index_map (block
        # column num_hops-1) -- only the [N, F] slab is ever read from HBM.
        x_spec = pl.BlockSpec((row_tile, F), lambda i: (i, num_hops - 1))
        return pl.pallas_call(
            _sgc_kernel,
            out_shape=out_shape,
            grid_spec=pltpu.PrefetchScalarGridSpec(
                num_scalar_prefetch=0,
                grid=grid,
                in_specs=[x_spec] + weight_specs,
                out_specs=out_spec,
            ),
            compiler_params=pltpu.CompilerParams(
                dimension_semantics=("parallel",)),
        )(xs, w1_t, b1_2d, w2_t, b2_2d)

    # Unaligned fallback: keep xs in HBM and DMA the last-hop chunk at element
    # offset KF-F with manual double buffering.  The cross-step prefetch
    # carries DMA state across grid iterations, so the axis must run
    # sequentially ("arbitrary").
    kernel = functools.partial(
        _sgc_kernel_gather, row_tile=row_tile, col_off=KF - F, feat=F,
        n_rows=N, n_tiles=n_tiles)
    return pl.pallas_call(
        kernel,
        out_shape=out_shape,
        grid_spec=pltpu.PrefetchScalarGridSpec(
            num_scalar_prefetch=0,
            grid=grid,
            in_specs=[pl.BlockSpec(memory_space=pl.ANY)] + weight_specs,
            out_specs=out_spec,
            scratch_shapes=[
                pltpu.VMEM((2, row_tile, F), xs.dtype),   # x double buffer
                pltpu.SemaphoreType.DMA((2,)),
            ],
        ),
        compiler_params=pltpu.CompilerParams(
            dimension_semantics=("arbitrary",)),
    )(xs, w1_t, b1_2d, w2_t, b2_2d)


def _init_linear(key, in_dim, out_dim, w_dtype=jnp.bfloat16, b_dtype=jnp.float32):
    """Deterministic init mirroring torch.nn.Linear (uniform(-1/sqrt(in), +))."""
    kw, kb = jax.random.split(key)
    bound = 1.0 / (in_dim ** 0.5)
    # Stored already transposed: [in_dim, out_dim] so the kernel does x @ W_t.
    w_t = jax.random.uniform(kw, (in_dim, out_dim), jnp.float32,
                             -bound, bound).astype(w_dtype)
    b = jax.random.uniform(kb, (out_dim,), jnp.float32,
                           -bound, bound).astype(b_dtype)
    return w_t, b


def _reference(xs, w1_t, b1, w2_t, b2, num_feats):
    """Pure-JAX reference with the same math and bf16 rounding points."""
    x_last = xs[:, -num_feats:]
    h = jnp.dot(x_last, w1_t, preferred_element_type=jnp.float32)
    h = jnp.tanh(h + b1)
    return jnp.dot(h.astype(w2_t.dtype), w2_t,
                   preferred_element_type=jnp.float32) + b2


if __name__ == "__main__":
    key = jax.random.PRNGKey(0)
    k_x, k_dense, k_out, k_x2 = jax.random.split(key, 4)

    # ---- Test 1: lane-aligned path (F % 128 == 0), default tiling ----------
    num_feats, num_labels, num_hops, num_nodes = 128, 8, 3, 512

    xs = jax.random.normal(k_x, (num_nodes, num_hops * num_feats),
                           jnp.float32).astype(jnp.bfloat16)
    w1_t, b1 = _init_linear(k_dense, num_feats, num_feats)    # dense
    w2_t, b2 = _init_linear(k_out, num_feats, num_labels)     # out_proj

    out = sgc_forward(xs, w1_t, b1, w2_t, b2, num_feats)  # grid=(8,), 64-row tiles
    out = jax.block_until_ready(out)
    ref = _reference(xs, w1_t, b1, w2_t, b2, num_feats)
    assert out.shape == (num_nodes, num_labels)
    assert jnp.allclose(out.astype(jnp.float32), ref, atol=5e-2, rtol=5e-2), (
        float(jnp.max(jnp.abs(out.astype(jnp.float32) - ref))))

    # ---- Test 2: unaligned fallback (F % 128 != 0): manual DMA at element
    #      offset, double buffering, and a partial last tile (56 rows). ------
    f2, n2, k2 = 64, 120, 2
    xs2 = jax.random.normal(k_x2, (n2, k2 * f2), jnp.float32).astype(jnp.bfloat16)
    w1b_t, b1b = _init_linear(k_dense, f2, f2)
    w2b_t, b2b = _init_linear(k_out, f2, num_labels)

    out2 = sgc_forward(xs2, w1b_t, b1b, w2b_t, b2b, f2, row_tile=64)
    out2 = jax.block_until_ready(out2)
    ref2 = _reference(xs2, w1b_t, b1b, w2b_t, b2b, f2)
    assert out2.shape == (n2, num_labels)
    assert jnp.allclose(out2.astype(jnp.float32), ref2, atol=5e-2, rtol=5e-2), (
        float(jnp.max(jnp.abs(out2.astype(jnp.float32) - ref2))))

    print("KERNEL_OK")
</pallas_src>

<mosaic_0001>
module attributes {stable_mosaic.version = 11 : i64} {
  func.func @_sgc_kernel(%arg0: i32, %arg1: memref<64x128xbf16, #tpu.memory_space<vmem>>, %arg2: memref<128x128xbf16, #tpu.memory_space<vmem>>, %arg3: memref<1x128xf32, #tpu.memory_space<vmem>>, %arg4: memref<128x8xbf16, #tpu.memory_space<vmem>>, %arg5: memref<1x8xf32, #tpu.memory_space<vmem>>, %arg6: memref<64x8xbf16, #tpu.memory_space<vmem>>) attributes {dimension_semantics = [#tpu.dimension_semantics<parallel>], iteration_bounds = array<i64: 8>, scalar_prefetch = 0 : i64, scratch_operands = 0 : i64, tpu.core_type = #tpu.core_type<tc>, window_params = [{transform_indices = @transform_0, window_bounds = array<i64: 64, 128>}, {pipeline_mode = #tpu.pipeline_mode<synchronous>, transform_indices = @transform_1, window_bounds = array<i64: 128, 128>}, {pipeline_mode = #tpu.pipeline_mode<synchronous>, transform_indices = @transform_2, window_bounds = array<i64: 1, 128>}, {pipeline_mode = #tpu.pipeline_mode<synchronous>, transform_indices = @transform_3, window_bounds = array<i64: 128, 8>}, {pipeline_mode = #tpu.pipeline_mode<synchronous>, transform_indices = @transform_4, window_bounds = array<i64: 1, 8>}, {transform_indices = @transform_5, window_bounds = array<i64: 64, 8>}]} {
    %c0 = arith.constant 0 : index
    %c0_0 = arith.constant 0 : index
    %0 = vector.load %arg1[%c0, %c0_0] : memref<64x128xbf16, #tpu.memory_space<vmem>>, vector<64x128xbf16>
    %c0_1 = arith.constant 0 : index
    %c0_2 = arith.constant 0 : index
    %1 = vector.load %arg2[%c0_1, %c0_2] : memref<128x128xbf16, #tpu.memory_space<vmem>>, vector<128x128xbf16>
    %c0_3 = arith.constant 0 : index
    %c0_4 = arith.constant 0 : index
    %2 = vector.load %arg3[%c0_3, %c0_4] : memref<1x128xf32, #tpu.memory_space<vmem>>, vector<1x128xf32>
    %c0_5 = arith.constant 0 : index
    %c0_6 = arith.constant 0 : index
    %3 = vector.load %arg4[%c0_5, %c0_6] : memref<128x8xbf16, #tpu.memory_space<vmem>>, vector<128x8xbf16>
    %c0_7 = arith.constant 0 : index
    %c0_8 = arith.constant 0 : index
    %4 = vector.load %arg5[%c0_7, %c0_8] : memref<1x8xf32, #tpu.memory_space<vmem>>, vector<1x8xf32>
    %cst = arith.constant dense<0.000000e+00> : vector<64x128xf32>
    %5 = tpu.matmul %0, %1, %cst {dimension_numbers = #tpu.dot_dimension_numbers<[1], [0], [0], [1], [0, 0, 1, 1], [], []>} : vector<64x128xbf16>, vector<128x128xbf16>, vector<64x128xf32> -> vector<64x128xf32>
    %6 = vector.broadcast %2 : vector<1x128xf32> to vector<64x128xf32>
    %7 = arith.addf %5, %6 : vector<64x128xf32>
    %8 = math.tanh %7 : vector<64x128xf32>
    %9 = arith.truncf %8 : vector<64x128xf32> to vector<64x128xbf16>
    %cst_9 = arith.constant dense<0.000000e+00> : vector<64x8xf32>
    %10 = tpu.matmul %9, %3, %cst_9 {dimension_numbers = #tpu.dot_dimension_numbers<[1], [0], [0], [1], [0, 0, 1, 1], [], []>} : vector<64x128xbf16>, vector<128x8xbf16>, vector<64x8xf32> -> vector<64x8xf32>
    %11 = vector.broadcast %4 : vector<1x8xf32> to vector<64x8xf32>
    %12 = arith.addf %10, %11 : vector<64x8xf32>
    %13 = arith.truncf %12 : vector<64x8xf32> to vector<64x8xbf16>
    %c0_10 = arith.constant 0 : index
    %c0_11 = arith.constant 0 : index
    %14 = vector.load %arg6[%c0_10, %c0_11] : memref<64x8xbf16, #tpu.memory_space<vmem>>, vector<64x8xbf16>
    tpu.vector_store %arg6[%c0_10, %c0_11], %13 {strides = array<i32>} : memref<64x8xbf16, #tpu.memory_space<vmem>>, vector<64x8xbf16>,
    return
  }
  func.func @transform_0(%arg0: i32) -> (i32, i32) {
    %c2_i32 = arith.constant 2 : i32
    %c0_i32 = arith.constant 0 : i32
    return %arg0, %c2_i32 : i32, i32
  }
  func.func @transform_1(%arg0: i32) -> (i32, i32) {
    %c0_i32 = arith.constant 0 : i32
    %c0_i32_0 = arith.constant 0 : i32
    %c0_i32_1 = arith.constant 0 : i32
    return %c0_i32, %c0_i32_0 : i32, i32
  }
  func.func @transform_2(%arg0: i32) -> (i32, i32) {
    %c0_i32 = arith.constant 0 : i32
    %c0_i32_0 = arith.constant 0 : i32
    %c0_i32_1 = arith.constant 0 : i32
    return %c0_i32, %c0_i32_0 : i32, i32
  }
  func.func @transform_3(%arg0: i32) -> (i32, i32) {
    %c0_i32 = arith.constant 0 : i32
    %c0_i32_0 = arith.constant 0 : i32
    %c0_i32_1 = arith.constant 0 : i32
    return %c0_i32, %c0_i32_0 : i32, i32
  }
  func.func @transform_4(%arg0: i32) -> (i32, i32) {
    %c0_i32 = arith.constant 0 : i32
    %c0_i32_0 = arith.constant 0 : i32
    %c0_i32_1 = arith.constant 0 : i32
    return %c0_i32, %c0_i32_0 : i32, i32
  }
  func.func @transform_5(%arg0: i32) -> (i32, i32) {
    %c0_i32 = arith.constant 0 : i32
    %c0_i32_0 = arith.constant 0 : i32
    return %arg0, %c0_i32 : i32, i32
  }
}

</mosaic_0001>

<llo_original>
// kernel: tpu_custom_call.1
$region0: #{tpu_custom_call.1}
  #allocation0 [shape = 'u32[]', space=smem, size = 0x4, offset = 0x4, fixed_abs, tag = 'smem constant byte address 0x4 - core index']
  #allocation1 [shape = 'u32[144,128]{1,0:T(1,128)}', space=vmem, size = 0x12000, scoped, tag = 'internal scratch']
  %s0 = inlined_call_operand.hbm [shape: bf16[512,384], index: 0, kind: input, shape index: {}]
  %s1 = inlined_call_operand.vmem [shape: bf16[128,128], index: 1, kind: input, shape index: {}]
  %s2 = inlined_call_operand.vmem [shape: f32[1,128], index: 2, kind: input, shape index: {}]
  %s3 = inlined_call_operand.vmem [shape: bf16[128,8], index: 3, kind: input, shape index: {}]
  %s4 = inlined_call_operand.vmem [shape: f32[1,8], index: 4, kind: input, shape index: {}]
  %s5 = inlined_call_operand.vmem [shape: bf16[512,8], index: 5, kind: output, shape index: {}]
  %s6 = sld [smem:[#allocation0]]
  $region57: #{tpu_custom_call.1} parent=0
    _
  %s8 = ssub.s32 1, %s6
  %s9 = scalar_select 0, %s8, %s6
  $region1: #{tpu_custom_call.1} parent=0
    #allocation2 [shape = 'u8[32768]{0}', space=vmem, size = 0x8000, scoped, tag = 'input window, operand 0']
    #allocation3 [shape = 's32[2]{0}', space=sflag, size = 0x8, scoped, tag = 'scoped memory for tpu_custom_call.1']
    %10 = vsyncpa [#allocation3], 0
    %s11 = scalar_lea.sflag [#allocation3], 1
    %12 = vsyncpa %s11, 0
    loop: start=0, step=1, limit=10
    $region2: #{tpu_custom_call.1} parent=1 // loop_pre_header
      _
    $region3: #{tpu_custom_call.1} parent=1 // loop_header
      %s14 = sphi 0, %s18
      %p15 = scmp.ge.s32.totalorder %s14, 10
      %s24 = sphi 0, %s26
      %s27 = sphi 0, %s24
      %s28 = sphi 0, %s27
      %s44 = sphi 0, %s28
      %s48 = sphi 0, %s48
      %s50 = sphi 0, %s48
      %s51 = sphi 0, %s50
      %s65 = sphi 0, %s51
      %s69 = sphi 0, %s69
      %s71 = sphi 0, %s69
      %s72 = sphi 0, %s71
      %s86 = sphi 0, %s72
      %s90 = sphi 0, %s90
      %s92 = sphi 0, %s90
      %s93 = sphi 0, %s92
      %s107 = sphi 0, %s93
      %s111 = sphi 0, %s111
      %s113 = sphi 0, %s111
      %s114 = sphi 0, %s113
      %s128 = sphi 0, %s114
      %s134 = sphi 0, %s136
      %s137 = sphi 0, %s134
      %s138 = sphi 0, %s137
      %s154 = sphi 0, %s138
    $region4: #{tpu_custom_call.1} parent=1 // loop_header_branch
      %17 = sbr.rel (%p15) target = $region8
    $region5: #{tpu_custom_call.1} parent=1 // loop_body
      %s19 = ssub.s32 %s14, 1
      %s20 = ssub.s32 %s14, 2
      %s21 = sadd.s32 %s14, 1
      %s22 = ssub.s32 %s14, %s21
      %p23 = scmp.eq.s32.totalorder %s22, 0
      %s25 = sadd.s32 %s24, 1
      %s26 = scalar_select %p23, %s24, %s25
      %p29 = pneg %p23
      %p30 = scmp.eq.s32.totalorder %s14, 7
      %p31 = por %p29, %p30
      %p32 = scmp.ne.s32.totalorder %s24, %s27
      %p33 = scmp.eq.s32.totalorder %s14, 0
      %p34 = por %p32, %p33
      %p35 = scmp.ne.s32.totalorder %s24, %s27
      %p36 = scmp.eq.s32.totalorder %s19, 7
      %p37 = por %p35, %p36
      %p38 = scmp.ne.s32.totalorder %s27, %s28
      %p39 = scmp.eq.s32.totalorder %s19, 0
      %p40 = por %p38, %p39
      %p41 = scmp.ne.s32.totalorder %s27, %s28
      %p42 = scmp.eq.s32.totalorder %s20, 7
      %p43 = por %p41, %p42
      %p45 = scmp.ne.s32.totalorder %s28, %s44
      %p46 = scmp.eq.s32.totalorder %s20, 0
      %p47 = por %p45, %p46
      %s49 = sadd.s32 %s48, 1
      %p52 = scmp.eq.s32.totalorder %s14, 7
      %p53 = scmp.ne.s32.totalorder %s48, %s50
      %p54 = scmp.eq.s32.totalorder %s14, 0
      %p55 = por %p53, %p54
      %p56 = scmp.ne.s32.totalorder %s48, %s50
      %p57 = scmp.eq.s32.totalorder %s19, 7
      %p58 = por %p56, %p57
      %p59 = scmp.ne.s32.totalorder %s50, %s51
      %p60 = scmp.eq.s32.totalorder %s19, 0
      %p61 = por %p59, %p60
      %p62 = scmp.ne.s32.totalorder %s50, %s51
      %p63 = scmp.eq.s32.totalorder %s20, 7
      %p64 = por %p62, %p63
      %p66 = scmp.ne.s32.totalorder %s51, %s65
      %p67 = scmp.eq.s32.totalorder %s20, 0
      %p68 = por %p66, %p67
      %s70 = sadd.s32 %s69, 1
      %p73 = scmp.eq.s32.totalorder %s14, 7
      %p74 = scmp.ne.s32.totalorder %s69, %s71
      %p75 = scmp.eq.s32.totalorder %s14, 0
      %p76 = por %p74, %p75
      %p77 = scmp.ne.s32.totalorder %s69, %s71
      %p78 = scmp.eq.s32.totalorder %s19, 7
      %p79 = por %p77, %p78
      %p80 = scmp.ne.s32.totalorder %s71, %s72
      %p81 = scmp.eq.s32.totalorder %s19, 0
      %p82 = por %p80, %p81
      %p83 = scmp.ne.s32.totalorder %s71, %s72
      %p84 = scmp.eq.s32.totalorder %s20, 7
      %p85 = por %p83, %p84
      %p87 = scmp.ne.s32.totalorder %s72, %s86
      %p88 = scmp.eq.s32.totalorder %s20, 0
      %p89 = por %p87, %p88
      %s91 = sadd.s32 %s90, 1
      %p94 = scmp.eq.s32.totalorder %s14, 7
      %p95 = scmp.ne.s32.totalorder %s90, %s92
      %p96 = scmp.eq.s32.totalorder %s14, 0
      %p97 = por %p95, %p96
      %p98 = scmp.ne.s32.totalorder %s90, %s92
      %p99 = scmp.eq.s32.totalorder %s19, 7
      %p100 = por %p98, %p99
      %p101 = scmp.ne.s32.totalorder %s92, %s93
      %p102 = scmp.eq.s32.totalorder %s19, 0
      %p103 = por %p101, %p102
      %p104 = scmp.ne.s32.totalorder %s92, %s93
      %p105 = scmp.eq.s32.totalorder %s20, 7
      %p106 = por %p104, %p105
      %p108 = scmp.ne.s32.totalorder %s93, %s107
      %p109 = scmp.eq.s32.totalorder %s20, 0
      %p110 = por %p108, %p109
      %s112 = sadd.s32 %s111, 1
      %p115 = scmp.eq.s32.totalorder %s14, 7
      %p116 = scmp.ne.s32.totalorder %s111, %s113
      %p117 = scmp.eq.s32.totalorder %s14, 0
      %p118 = por %p116, %p117
      %p119 = scmp.ne.s32.totalorder %s111, %s113
      %p120 = scmp.eq.s32.totalorder %s19, 7
      %p121 = por %p119, %p120
      %p122 = scmp.ne.s32.totalorder %s113, %s114
      %p123 = scmp.eq.s32.totalorder %s19, 0
      %p124 = por %p122, %p123
      %p125 = scmp.ne.s32.totalorder %s113, %s114
      %p126 = scmp.eq.s32.totalorder %s20, 7
      %p127 = por %p125, %p126
      %p129 = scmp.ne.s32.totalorder %s114, %s128
      %p130 = scmp.eq.s32.totalorder %s20, 0
      %p131 = por %p129, %p130
      %s132 = ssub.s32 %s14, %s21
      %p133 = scmp.eq.s32.totalorder %s132, 0
      %s135 = sadd.s32 %s134, 1
      %s136 = scalar_select %p133, %s134, %s135
      %p139 = pneg %p133
      %p140 = scmp.eq.s32.totalorder %s14, 7
      %p141 = por %p139, %p140
      %p142 = scmp.ne.s32.totalorder %s134, %s137
      %p143 = scmp.eq.s32.totalorder %s14, 0
      %p144 = por %p142, %p143
      %p145 = scmp.ne.s32.totalorder %s134, %s137
      %p146 = scmp.eq.s32.totalorder %s19, 7
      %p147 = por %p145, %p146
      %p148 = scmp.ne.s32.totalorder %s137, %s138
      %p149 = scmp.eq.s32.totalorder %s19, 0
      %p150 = por %p148, %p149
      %p151 = scmp.ne.s32.totalorder %s137, %s138
      %p152 = scmp.eq.s32.totalorder %s20, 7
      %p153 = por %p151, %p152
      %p155 = scmp.ne.s32.totalorder %s138, %s154
      %p156 = scmp.eq.s32.totalorder %s20, 0
      %p157 = por %p155, %p156
      %p158 = scmp.le.s32.totalorder 1, %s14
      %p159 = scmp.lt.s32.totalorder %s14, 9
      %p160 = pnand %p158, %p159
      %p161 = pneg %p160
      // Predicated region
      $region9: #{tpu_custom_call.1} parent=5 // pred_check
        _
      $region10: #{tpu_custom_call.1} parent=5 // pred_check_branch
        %163 = sbr.rel (%p160) target = $region12
      $region11: #{tpu_custom_call.1} parent=5 // pred_region
        %s164 = ssub.s32 %s14, 1
        // Predicated region
        $region13: #{tpu_custom_call.1} parent=11 // pred_check
          %p165 = pneg %p61
        $region14: #{tpu_custom_call.1} parent=11 // pred_check_branch
          %167 = sbr.rel (%p165) target = $region16
        $region15: #{tpu_custom_call.1} parent=11 // pred_region
          _
        $region16: #{tpu_custom_call.1} parent=11 // pred_fallthru
          _
        // Predicated region
        $region17: #{tpu_custom_call.1} parent=11 // pred_check
          %p168 = pneg %p82
        $region18: #{tpu_custom_call.1} parent=11 // pred_check_branch
          %170 = sbr.rel (%p168) target = $region20
        $region19: #{tpu_custom_call.1} parent=11 // pred_region
          _
        $region20: #{tpu_custom_call.1} parent=11 // pred_fallthru
          _
        // Predicated region
        $region21: #{tpu_custom_call.1} parent=11 // pred_check
          %p171 = pneg %p103
        $region22: #{tpu_custom_call.1} parent=11 // pred_check_branch
          %173 = sbr.rel (%p171) target = $region24
        $region23: #{tpu_custom_call.1} parent=11 // pred_region
          _
        $region24: #{tpu_custom_call.1} parent=11 // pred_fallthru
          _
        // Predicated region
        $region25: #{tpu_custom_call.1} parent=11 // pred_check
          %p174 = pneg %p124
        $region26: #{tpu_custom_call.1} parent=11 // pred_check_branch
          %176 = sbr.rel (%p174) target = $region28
        $region27: #{tpu_custom_call.1} parent=11 // pred_region
          _
        $region28: #{tpu_custom_call.1} parent=11 // pred_fallthru
          _
      $region12: #{tpu_custom_call.1} parent=5 // pred_fallthru
        _
      %p177 = scmp.lt.s32.totalorder %s14, 8
      // Predicated region
      $region29: #{tpu_custom_call.1} parent=5 // pred_check
        %p178 = pneg %p177
      $region30: #{tpu_custom_call.1} parent=5 // pred_check_branch
        %180 = sbr.rel (%p178) target = $region32
      $region31: #{tpu_custom_call.1} parent=5 // pred_region
        // Predicated region
        $region33: #{tpu_custom_call.1} parent=31 // pred_check
          %p181 = pneg %p34
        $region34: #{tpu_custom_call.1} parent=31 // pred_check_branch
          %183 = sbr.rel (%p181) target = $region36
        $region35: #{tpu_custom_call.1} parent=31 // pred_region
          %s184 = sand.u32 %s24, 1
          %s185 = scalar_lea.sflag [#allocation3], %s184
          %s186 = sand.u32 %s24, 1
          %s187 = smul.addr %s186, 32
          %s188 = scalar_lea.vmem [#allocation2], %s187
          %s189 = smul.u32 8, %s14
          %s191 = ssub.s32 512, 512
          %192 = vsyncadd %s185, %s191
          %s193 = smul.addr %s189, 3
          %s194 = sadd.s32 2, %s193
          %s195 = smul.addr %s194, 64
          %s196 = scalar_lea.hbm %s0, %s195
          %s197 = sshll.u32 %s188, 4
          %s198 = int_to_ptr.vmem [resolvable:$true] %s197
          %203 = dma.hbm_to_vmem [thread:$0]  %s196, 512, %s198, %s185, 192, 64, 4
        $region36: #{tpu_custom_call.1} parent=31 // pred_fallthru
          _
      $region32: #{tpu_custom_call.1} parent=5 // pred_fallthru
        _
      %p204 = scmp.le.s32.totalorder 1, %s14
      %p205 = scmp.lt.s32.totalorder %s14, 9
      %p206 = pnand %p204, %p205
      %p207 = pneg %p206
      // Predicated region
      $region37: #{tpu_custom_call.1} parent=5 // pred_check
        _
      $region38: #{tpu_custom_call.1} parent=5 // pred_check_branch
        %209 = sbr.rel (%p206) target = $region40
      $region39: #{tpu_custom_call.1} parent=5 // pred_region
        %s210 = ssub.s32 %s14, 1
        %s211 = sand.u32 %s27, 1
        %s212 = scalar_lea.sflag [#allocation3], %s211
        %s213 = sand.u32 %s27, 1
        %s214 = smul.addr %s213, 32
        %s215 = scalar_lea.vmem [#allocation2], %s214
        // Predicated region
        $region41: #{tpu_custom_call.1} parent=39 // pred_check
          %p216 = pneg %p40
        $region42: #{tpu_custom_call.1} parent=39 // pred_check_branch
          %218 = sbr.rel (%p216) target = $region44
        $region43: #{tpu_custom_call.1} parent=39 // pred_region
          %219 = dma.done %s212, 512
        $region44: #{tpu_custom_call.1} parent=39 // pred_fallthru
          _
        %s220 = sand.u32 %s27, 1
        %s221 = scalar_lea.sflag [#allocation3], %s220
        %s222 = sand.u32 %s27, 1
        %s223 = smul.addr %s222, 32
        %s224 = scalar_lea.vmem [#allocation2], %s223
        %p225 = pneg %p40
        %p226 = pneg %p37
        %p227 = pneg %p61
        %p228 = pneg %p58
        %p229 = pneg %p82
        %p230 = pneg %p79
        %p231 = pneg %p103
        %p232 = pneg %p100
        %p233 = pneg %p124
        %p234 = pneg %p121
        %p235 = pneg %p150
        %p236 = pneg %p147
        %s237 = smul.u32 8, %s19
        %p238 = scmp.lt.s32.totalorder %s237, 63
        %s239 = scalar_select %p238, %s237, 63
        %s240 = smul.addr %s239, 4
        %s241 = scalar_lea.vmem %s5, %s240
        %s242 = smul.u32 8, %s19
        %s243 = smul.u32 8, %s19
        %p244 = scmp.lt.s32.totalorder %s243, 63
        %s245 = scalar_select %p244, %s243, 63
        %s246 = smul.addr %s245, 4
        %s247 = scalar_lea.vmem %s5, %s246
        %s248 = smul.u32 8, %s19
        %v250 = vld [vmem:[%s215] sm:$0xf]
        %v251 = vld [vmem:[%s215 + $0x4] sm:$0xf]
        %v252 = vld [vmem:[%s215 + $0x8] sm:$0xf]
        %v253 = vld [vmem:[%s215 + $0xc] sm:$0xf]
        %v254 = vld [vmem:[%s215 + $0x10] sm:$0xf]
        %v255 = vld [vmem:[%s215 + $0x14] sm:$0xf]
        %v256 = vld [vmem:[%s215 + $0x18] sm:$0xf]
        %v257 = vld [vmem:[%s215 + $0x1c] sm:$0xf]
        %v258 = vld [vmem:[%s1] sm:$0xf]
        %v259 = vld [vmem:[%s1 + $0x4] sm:$0xf]
        %v260 = vld [vmem:[%s1 + $0x8] sm:$0xf]
        %v261 = vld [vmem:[%s1 + $0xc] sm:$0xf]
        %v262 = vld [vmem:[%s1 + $0x10] sm:$0xf]
        %v263 = vld [vmem:[%s1 + $0x14] sm:$0xf]
        %v264 = vld [vmem:[%s1 + $0x18] sm:$0xf]
        %v265 = vld [vmem:[%s1 + $0x1c] sm:$0xf]
        %v266 = vld [vmem:[%s1 + $0x20] sm:$0xf]
        %v267 = vld [vmem:[%s1 + $0x24] sm:$0xf]
        %v268 = vld [vmem:[%s1 + $0x28] sm:$0xf]
        %v269 = vld [vmem:[%s1 + $0x2c] sm:$0xf]
        %v270 = vld [vmem:[%s1 + $0x30] sm:$0xf]
        %v271 = vld [vmem:[%s1 + $0x34] sm:$0xf]
        %v272 = vld [vmem:[%s1 + $0x38] sm:$0xf]
        %v273 = vld [vmem:[%s1 + $0x3c] sm:$0xf]
        %v274 = vld [vmem:[%s2] sm:$0x1]
        %v275 = vld [vmem:[%s3] sm:$0xf]
        %v276 = vld [vmem:[%s3 + $0x4] sm:$0xf]
        %v277 = vld [vmem:[%s3 + $0x8] sm:$0xf]
        %v278 = vld [vmem:[%s3 + $0xc] sm:$0xf]
        %v279 = vld [vmem:[%s3 + $0x10] sm:$0xf]
        %v280 = vld [vmem:[%s3 + $0x14] sm:$0xf]
        %v281 = vld [vmem:[%s3 + $0x18] sm:$0xf]
        %v282 = vld [vmem:[%s3 + $0x1c] sm:$0xf]
        %v283 = vld [vmem:[%s3 + $0x20] sm:$0xf]
        %v284 = vld [vmem:[%s3 + $0x24] sm:$0xf]
        %v285 = vld [vmem:[%s3 + $0x28] sm:$0xf]
        %v286 = vld [vmem:[%s3 + $0x2c] sm:$0xf]
        %v287 = vld [vmem:[%s3 + $0x30] sm:$0xf]
        %v288 = vld [vmem:[%s3 + $0x34] sm:$0xf]
        %v289 = vld [vmem:[%s3 + $0x38] sm:$0xf]
        %v290 = vld [vmem:[%s3 + $0x3c] sm:$0xf]
        %v291 = vld [vmem:[%s4] sm:$0x1]
        %v293 = vlaneseq
        %v294 = vshrl.u32 %v293, 7
        %v295 = vsub.s32 0, %v294
        %v296 = vrot.slane %v274, %v295
        %v306 = vunpack.c.l.b16 %v250
        %v307 = vunpack.c.l.b16 %v251
        %v308 = vunpack.c.l.b16 %v252
        %v309 = vunpack.c.l.b16 %v253
        %v310 = vunpack.c.l.b16 %v254
        %v311 = vunpack.c.l.b16 %v255
        %v312 = vunpack.c.l.b16 %v256
        %v313 = vunpack.c.l.b16 %v257
        %v314 = vpack.c.b16 %v307, %v306
        %v315 = vpack.c.b16 %v309, %v308
        %v316 = vpack.c.b16 %v311, %v310
        %v317 = vpack.c.b16 %v313, %v312
        %v338 = vunpack.c.l.b16 %v258
        %v339 = vunpack.c.l.b16 %v259
        %v340 = vunpack.c.l.b16 %v260
        %v341 = vunpack.c.l.b16 %v261
        %v342 = vunpack.c.l.b16 %v262
        %v343 = vunpack.c.l.b16 %v263
        %v344 = vunpack.c.l.b16 %v264
        %v345 = vunpack.c.l.b16 %v265
        %v346 = vunpack.c.l.b16 %v266
        %v347 = vunpack.c.l.b16 %v267
        %v348 = vunpack.c.l.b16 %v268
        %v349 = vunpack.c.l.b16 %v269
        %v350 = vunpack.c.l.b16 %v270
        %v351 = vunpack.c.l.b16 %v271
        %v352 = vunpack.c.l.b16 %v272
        %v353 = vunpack.c.l.b16 %v273
        %v354 = vpack.c.b16 %v339, %v338
        %v355 = vpack.c.b16 %v341, %v340
        %v356 = vpack.c.b16 %v343, %v342
        %v357 = vpack.c.b16 %v345, %v344
        %v358 = vpack.c.b16 %v347, %v346
        %v359 = vpack.c.b16 %v349, %v348
        %v360 = vpack.c.b16 %v351, %v350
        %v361 = vpack.c.b16 %v353, %v352
        %370 = vmatprep.subr.bf16.mxu0 0
        %371 = vmatpush1.bf16.msra.mxu0 %v354
        %372 = vmatprep.subr.bf16.mxu0 0
        %373 = vmatpush1.bf16.msra.mxu0 %v355
        %374 = vmatprep.subr.bf16.mxu0 0
        %375 = vmatpush1.bf16.msra.mxu0 %v356
        %376 = vmatprep.subr.bf16.mxu0 0
        %377 = vmatpush1.bf16.msra.mxu0 %v357
        %378 = vmatprep.subr.bf16.mxu0 0
        %379 = vmatpush1.bf16.msra.mxu0 %v358
        %380 = vmatprep.subr.bf16.mxu0 0
        %381 = vmatpush1.bf16.msra.mxu0 %v359
        %382 = vmatprep.subr.bf16.mxu0 0
        %383 = vmatpush1.bf16.msra.mxu0 %v360
        %384 = vmatprep.subr.bf16.mxu0 0
        %385 = vmatpush1.bf16.msra.mxu0 %v361
        %386 = vmatprep.subr.bf16.mxu0 0
        %387 = vmatpush1.bf16.msra.mxu0 0
        %388 = vmatprep.subr.bf16.mxu0 0
        %389 = vmatpush1.bf16.msra.mxu0 0
        %390 = vmatprep.subr.bf16.mxu0 0
        %391 = vmatpush1.bf16.msra.mxu0 0
        %392 = vmatprep.subr.bf16.mxu0 0
        %393 = vmatpush1.bf16.msra.mxu0 0
        %394 = vmatprep.subr.bf16.mxu0 0
        %395 = vmatpush1.bf16.msra.mxu0 0
        %396 = vmatprep.subr.bf16.mxu0 0
        %397 = vmatpush1.bf16.msra.mxu0 0
        %398 = vmatprep.subr.bf16.mxu0 0
        %399 = vmatpush1.bf16.msra.mxu0 0
        %400 = vmatprep.subr.bf16.mxu0 0
        %401 = vmatpush1.bf16.msra.mxu0 0
        %402 = vmatprep.mubr.bf16.mxu0 0
        %403 = vmatmul.mubr.bf16.gmra.mrb[0].mxu0 %v314
        %v404 = vpop.f32.mrb[0].mxu0
        %v405 = vadd.f32 %v296, %v404
        %v406 = vpop.f32.mrb[0].mxu0
        %v407 = vpop.f32.mrb[0].mxu0
        %v408 = vadd.f32 %v296, %v407
        %v409 = vpop.f32.mrb[0].mxu0
        %410 = vmatprep.mubr.bf16.mxu0 0
        %411 = vmatmul.mubr.bf16.gmra.mrb[0].mxu0 %v315
        %v412 = vpop.f32.mrb[0].mxu0
        %v413 = vadd.f32 %v296, %v412
        %v414 = vpop.f32.mrb[0].mxu0
        %v415 = vpop.f32.mrb[0].mxu0
        %v416 = vadd.f32 %v296, %v415
        %v417 = vpop.f32.mrb[0].mxu0
        %418 = vmatprep.mubr.bf16.mxu0 0
        %419 = vmatmul.mubr.bf16.gmra.mrb[0].mxu0 %v316
        %v420 = vpop.f32.mrb[0].mxu0
        %v421 = vadd.f32 %v296, %v420
        %v422 = vpop.f32.mrb[0].mxu0
        %v423 = vpop.f32.mrb[0].mxu0
        %v424 = vadd.f32 %v296, %v423
        %v425 = vpop.f32.mrb[0].mxu0
        %426 = vmatprep.mubr.bf16.mxu0 0
        %427 = vmatmul.mubr.bf16.gmra.mrb[0].mxu0 %v317
        %v428 = vpop.f32.mrb[0].mxu0
        %v429 = vadd.f32 %v296, %v428
        %v430 = vpop.f32.mrb[0].mxu0
        %v431 = vpop.f32.mrb[0].mxu0
        %v432 = vadd.f32 %v296, %v431
        %v433 = vpop.f32.mrb[0].mxu0
        %434 = vdwg.mxu0
        %v435 = vtanh.pop %v405
        %v436 = vtanh.pop %v408
        %v437 = vtanh.pop %v413
        %v438 = vtanh.pop %v416
        %v439 = vtanh.pop %v421
        %v440 = vtanh.pop %v424
        %v441 = vtanh.pop %v429
        %v442 = vtanh.pop %v432
        %v443 = vpack.c.bf16 %v436, %v435
        %v444 = vpack.c.bf16 %v438, %v437
        %v445 = vpack.c.bf16 %v440, %v439
        %v446 = vpack.c.bf16 %v442, %v441
        %v448 = vlaneseq
        %v449 = vshrl.u32 %v448, 7
        %v450 = vsub.s32 0, %v449
        %v451 = vrot.slane %v291, %v450
        %v469 = vunpack.c.l.b16 %v275
        %v470 = vunpack.c.l.b16 %v276
        %v471 = vunpack.c.l.b16 %v277
        %v472 = vunpack.c.l.b16 %v278
        %v473 = vunpack.c.l.b16 %v279
        %v474 = vunpack.c.l.b16 %v280
        %v475 = vunpack.c.l.b16 %v281
        %v476 = vunpack.c.l.b16 %v282
        %v477 = vunpack.c.l.b16 %v283
        %v478 = vunpack.c.l.b16 %v284
        %v479 = vunpack.c.l.b16 %v285
        %v480 = vunpack.c.l.b16 %v286
        %v481 = vunpack.c.l.b16 %v287
        %v482 = vunpack.c.l.b16 %v288
        %v483 = vunpack.c.l.b16 %v289
        %v484 = vunpack.c.l.b16 %v290
        %v485 = vpack.c.b16 %v470, %v469
        %v486 = vpack.c.b16 %v472, %v471
        %v487 = vpack.c.b16 %v474, %v473
        %v488 = vpack.c.b16 %v476, %v475
        %v489 = vpack.c.b16 %v478, %v477
        %v490 = vpack.c.b16 %v480, %v479
        %v491 = vpack.c.b16 %v482, %v481
        %v492 = vpack.c.b16 %v484, %v483
        %501 = vmatprep.subr.bf16.mxu0 0
        %502 = vmatpush1.bf16.msra.mxu0 %v485
        %503 = vmatprep.subr.bf16.mxu0 0
        %504 = vmatpush1.bf16.msra.mxu0 %v486
        %505 = vmatprep.subr.bf16.mxu0 0
        %506 = vmatpush1.bf16.msra.mxu0 %v487
        %507 = vmatprep.subr.bf16.mxu0 0
        %508 = vmatpush1.bf16.msra.mxu0 %v488
        %509 = vmatprep.subr.bf16.mxu0 0
        %510 = vmatpush1.bf16.msra.mxu0 %v489
        %511 = vmatprep.subr.bf16.mxu0 0
        %512 = vmatpush1.bf16.msra.mxu0 %v490
        %513 = vmatprep.subr.bf16.mxu0 0
        %514 = vmatpush1.bf16.msra.mxu0 %v491
        %515 = vmatprep.subr.bf16.mxu0 0
        %516 = vmatpush1.bf16.msra.mxu0 %v492
        %517 = vmatprep.subr.bf16.mxu0 0
        %518 = vmatpush1.bf16.msra.mxu0 0
        %519 = vmatprep.subr.bf16.mxu0 0
        %520 = vmatpush1.bf16.msra.mxu0 0
        %521 = vmatprep.subr.bf16.mxu0 0
        %522 = vmatpush1.bf16.msra.mxu0 0
        %523 = vmatprep.subr.bf16.mxu0 0
        %524 = vmatpush1.bf16.msra.mxu0 0
        %525 = vmatprep.subr.bf16.mxu0 0
        %526 = vmatpush1.bf16.msra.mxu0 0
        %527 = vmatprep.subr.bf16.mxu0 0
        %528 = vmatpush1.bf16.msra.mxu0 0
        %529 = vmatprep.subr.bf16.mxu0 0
        %530 = vmatpush1.bf16.msra.mxu0 0
        %531 = vmatprep.subr.bf16.mxu0 0
        %532 = vmatpush1.bf16.msra.mxu0 0
        %533 = vmatprep.mubr.bf16.mxu0 0
        %534 = vmatmul.mubr.bf16.gmra.mrb[0].mxu0 %v443
        %v535 = vpop.f32.mrb[0].mxu0
        %v536 = vadd.f32 %v451, %v535
        %v537 = vpop.f32.mrb[0].mxu0
        %v538 = vpop.f32.mrb[0].mxu0
        %v539 = vadd.f32 %v451, %v538
        %v540 = vpop.f32.mrb[0].mxu0
        %541 = vmatprep.mubr.bf16.mxu0 0
        %542 = vmatmul.mubr.bf16.gmra.mrb[0].mxu0 %v444
        %v543 = vpop.f32.mrb[0].mxu0
        %v544 = vadd.f32 %v451, %v543
        %v545 = vpop.f32.mrb[0].mxu0
        %v546 = vpop.f32.mrb[0].mxu0
        %v547 = vadd.f32 %v451, %v546
        %v548 = vpop.f32.mrb[0].mxu0
        %549 = vmatprep.mubr.bf16.mxu0 0
        %550 = vmatmul.mubr.bf16.gmra.mrb[0].mxu0 %v445
        %v551 = vpop.f32.mrb[0].mxu0
        %v552 = vadd.f32 %v451, %v551
        %v553 = vpop.f32.mrb[0].mxu0
        %v554 = vpop.f32.mrb[0].mxu0
        %v555 = vadd.f32 %v451, %v554
        %v556 = vpop.f32.mrb[0].mxu0
        %557 = vmatprep.mubr.bf16.mxu0 0
        %558 = vmatmul.mubr.bf16.gmra.mrb[0].mxu0 %v446
        %v559 = vpop.f32.mrb[0].mxu0
        %v560 = vadd.f32 %v451, %v559
        %v561 = vpop.f32.mrb[0].mxu0
        %v562 = vpop.f32.mrb[0].mxu0
        %v563 = vadd.f32 %v451, %v562
        %v564 = vpop.f32.mrb[0].mxu0
        %565 = vdwg.mxu0
        %v566 = vpack.c.bf16 %v539, %v536
        %v567 = vpack.c.bf16 %v547, %v544
        %v568 = vpack.c.bf16 %v555, %v552
        %v569 = vpack.c.bf16 %v563, %v560
        %v574 = vunpack.c.l.b16 %v566
        %v575 = vunpack.c.h.b16 %v566
        %v576 = vunpack.c.l.b16 %v567
        %v577 = vunpack.c.h.b16 %v567
        %v578 = vunpack.c.l.b16 %v568
        %v579 = vunpack.c.h.b16 %v568
        %v580 = vunpack.c.l.b16 %v569
        %v581 = vunpack.c.h.b16 %v569
        %v582 = vpack.c.b16 %v574, %v574
        %v583 = vpack.c.b16 %v575, %v575
        %v584 = vpack.c.b16 %v576, %v576
        %v585 = vpack.c.b16 %v577, %v577
        %v586 = vpack.c.b16 %v578, %v578
        %v587 = vpack.c.b16 %v579, %v579
        %v588 = vpack.c.b16 %v580, %v580
        %v589 = vpack.c.b16 %v581, %v581
        %vm598 = vcmask 60416
        %599 = vst.msk [vmem:[%s247] sm:$0xf] %vm598, %v582
        %600 = vst.msk [vmem:[%s247 + $0x4] sm:$0xf] %vm598, %v583
        %601 = vst.msk [vmem:[%s247 + $0x8] sm:$0xf] %vm598, %v584
        %602 = vst.msk [vmem:[%s247 + $0xc] sm:$0xf] %vm598, %v585
        %603 = vst.msk [vmem:[%s247 + $0x10] sm:$0xf] %vm598, %v586
        %604 = vst.msk [vmem:[%s247 + $0x14] sm:$0xf] %vm598, %v587
        %605 = vst.msk [vmem:[%s247 + $0x18] sm:$0xf] %vm598, %v588
        %606 = vst.msk [vmem:[%s247 + $0x1c] sm:$0xf] %vm598, %v589
        %s607 = smul.u32 8, %s19
        %p608 = scmp.lt.s32.totalorder %s607, 63
        %s609 = scalar_select %p608, %s607, 63
        %s610 = smul.addr %s609, 4
        %s611 = scalar_lea.vmem %s5, %s610
        // Predicated region
        $region45: #{tpu_custom_call.1} parent=39 // pred_check
          %p612 = pneg %p147
        $region46: #{tpu_custom_call.1} parent=39 // pred_check_branch
          %614 = sbr.rel (%p612) target = $region48
        $region47: #{tpu_custom_call.1} parent=39 // pred_region
          %s615 = smul.u32 8, %s19
        $region48: #{tpu_custom_call.1} parent=39 // pred_fallthru
          _
      $region40: #{tpu_custom_call.1} parent=5 // pred_fallthru
        _
      %p616 = scmp.le.s32.totalorder 2, %s14
      // Predicated region
      $region49: #{tpu_custom_call.1} parent=5 // pred_check
        %p617 = pneg %p616
      $region50: #{tpu_custom_call.1} parent=5 // pred_check_branch
        %619 = sbr.rel (%p617) target = $region52
      $region51: #{tpu_custom_call.1} parent=5 // pred_region
        %s620 = ssub.s32 %s14, 2
        // Predicated region
        $region53: #{tpu_custom_call.1} parent=51 // pred_check
          %p621 = pneg %p153
        $region54: #{tpu_custom_call.1} parent=51 // pred_check_branch
          %623 = sbr.rel (%p621) target = $region56
        $region55: #{tpu_custom_call.1} parent=51 // pred_region
          %s624 = smul.u32 8, %s20
          %p625 = scmp.lt.s32.totalorder %s624, 63
          %s626 = scalar_select %p625, %s624, 63
          %s627 = smul.addr %s626, 4
          %s628 = scalar_lea.vmem %s5, %s627
        $region56: #{tpu_custom_call.1} parent=51 // pred_fallthru
          _
      $region52: #{tpu_custom_call.1} parent=5 // pred_fallthru
        _
    $region6: #{tpu_custom_call.1} parent=1 // loop_footer
      %s18 = sadd.s32 1, %s14
    $region7: #{tpu_custom_call.1} parent=1 // loop_footer_branch
      %13 = sbr.rel target = $region3
    $region8: #{tpu_custom_call.1} parent=1 // loop_exit
      _
    %629 = vsyncpa [#allocation3], 1
    %s630 = scalar_lea.sflag [#allocation3], 1
    %631 = vsyncpa %s630, 1

</llo_original>
